<compile_context>
chip_gen: v5e
topology: v5e:2x2
jax: 0.10.0
libtpu: 0.0.40
codegen_flags: <defaults>
</compile_context>

<pallas_src>
import functools

import jax
import jax.numpy as jnp
from jax import lax
from jax.experimental import pallas as pl
from jax.experimental.pallas import tpu as pltpu


def _round_up(x, m):
    return ((x + m - 1) // m) * m


def _cdiv(a, b):
    return (a + b - 1) // b


def mlp_kernel(x_ref, w0_ref, b0_ref, w1_ref, b1_ref, w2_ref, b2_ref, o_ref,
               *, chunk):
    """Fused 3-layer MLP over one batch tile, processed in row sub-chunks.

    MXU operands use the wrapper-chosen dtype (bf16 by default) with f32
    accumulation.  Layer-0/1 bias+ReLU run in b0_ref.dtype (f32 on v5e, bf16 on
    v6e/v7x); layer-2 bias add stays f32.  The row-chunk loop bounds vreg live
    ranges so large batch tiles don't spill.
    """
    bt = x_ref.shape[0]
    mxu_dtype = w0_ref.dtype
    act_dtype = b0_ref.dtype

    # Resident weights/biases: tiny at the target dims, load once per step.
    # (For hidden_dim in the thousands, read the refs inside `process` instead
    # so they stay in VMEM rather than vregs.)
    w0, b0 = w0_ref[...], b0_ref[...]
    w1, b1 = w1_ref[...], b1_ref[...]
    w2, b2 = w2_ref[...], b2_ref[...]

    def process(start, size):
        xs = x_ref[pl.ds(start, size), :]
        # Layer 0: Linear(in, hid) + ReLU
        h = jnp.dot(xs, w0, preferred_element_type=jnp.float32)
        h = jnp.maximum(h.astype(act_dtype) + b0, 0)
        # Layer 1: Linear(hid, hid) + ReLU
        h = jnp.dot(h.astype(mxu_dtype), w1, preferred_element_type=jnp.float32)
        h = jnp.maximum(h.astype(act_dtype) + b1, 0)
        # Layer 2: Linear(hid, out); bias add in f32 for output precision.
        out = jnp.dot(h.astype(mxu_dtype), w2, preferred_element_type=jnp.float32)
        out = out + b2
        o_ref[pl.ds(start, size), :] = out.astype(o_ref.dtype)

    n_full, rem = divmod(bt, chunk)
    if n_full == 1 and rem == 0:
        process(0, chunk)
    else:
        if n_full > 0:
            def body(i, carry):
                process(pl.multiple_of(i * chunk, chunk), chunk)
                return carry
            lax.fori_loop(0, n_full, body, 0, unroll=True)
        if rem:
            process(n_full * chunk, rem)   # static tail (rem is a trace-time int)


def _auto_act_dtype(compute_dtype):
    """bf16 bias+ReLU only where the VPU has a bf16 path (v6e/v7x); else f32."""
    if jnp.dtype(compute_dtype) != jnp.dtype(jnp.bfloat16):
        return jnp.float32
    try:
        kind = jax.devices()[0].device_kind.lower()
    except Exception:
        return jnp.float32
    if any(g in kind for g in ("v2", "v3", "v4", "v5")):
        return jnp.float32   # no bf16 VALU on v5e and earlier
    return jnp.bfloat16


def mlp_forward(x, params, *, batch_tile=2048, row_chunk=256,
                compute_dtype=jnp.bfloat16, act_dtype=None, out_dtype=None):
    """Run the fused MLP kernel, tiling (and zero-padding) over batch.

    compute_dtype: dtype fed to the MXU (None / f32 => exact module semantics).
    act_dtype:     dtype for layer-0/1 bias+ReLU (None => auto per generation).
    out_dtype:     output dtype (None => x.dtype; pass bf16 to halve out bytes).
    """
    w0, b0, w1, b1, w2, b2 = params
    B, d_in = x.shape
    d_hid = w0.shape[1]
    d_out = w2.shape[1]

    if compute_dtype is None:
        compute_dtype = x.dtype
    if out_dtype is None:
        out_dtype = x.dtype
    if act_dtype is None:
        act_dtype = _auto_act_dtype(compute_dtype)

    # ---- batch tiling -------------------------------------------------------
    # Split the real batch evenly across grid steps (no ~2x padding blow-up for
    # awkward B); keep an even number of steps for big batches so the
    # "parallel" axis shards across v7x's two TensorCores; keep per-step tiles
    # large (step overhead ~0.35us) and bound vregs with the row-chunk loop.
    n_steps = max(1, _cdiv(B, batch_tile))
    if n_steps > 1 and n_steps % 2:
        n_steps += 1
    bt = _round_up(_cdiv(B, n_steps), 8)
    b_pad = bt * n_steps
    chunk = min(_round_up(row_chunk, 8), bt)
    grid = (n_steps,)

    # ---- operand casts ------------------------------------------------------
    x_c = x.astype(compute_dtype)
    if b_pad != B:
        x_c = jnp.pad(x_c, ((0, b_pad - B), (0, 0)))
    w0_c, w1_c, w2_c = (w.astype(compute_dtype) for w in (w0, w1, w2))
    b0_a, b1_a = (b.astype(act_dtype) for b in (b0, b1))
    b2_f = b2.astype(jnp.float32)

    # ---- VMEM budget --------------------------------------------------------
    def _tile_bytes(rows, cols, itemsize):
        # (8,128)-tiled VMEM footprint; lane padding dominates at narrow dims.
        return _round_up(max(rows, 1), 8) * _round_up(max(cols, 1), 128) * itemsize

    mxu_b = jnp.dtype(compute_dtype).itemsize
    act_b = jnp.dtype(act_dtype).itemsize
    out_b = jnp.dtype(out_dtype).itemsize
    weights_vmem = (_tile_bytes(d_in, d_hid, mxu_b)
                    + _tile_bytes(d_hid, d_hid, mxu_b)
                    + _tile_bytes(d_hid, d_out, mxu_b)
                    + 2 * _tile_bytes(1, d_hid, act_b)
                    + _tile_bytes(1, d_out, 4))
    streamed_vmem = 2 * (_tile_bytes(bt, d_in, mxu_b)
                         + _tile_bytes(bt, d_out, out_b))   # double-buffered x/out
    work_vmem = 3 * _tile_bytes(chunk, d_hid, 4)            # per-chunk intermediates

    def _compiler_params(weight_bufs):
        need = weights_vmem * weight_bufs + streamed_vmem + work_vmem
        # Explicit scoped-VMEM budget, capped at v7x's 64 MiB physical VMEM so
        # one configuration stays valid across v5e / v6e / v7x.
        limit = int(min(max(2 * need + (4 << 20), 16 << 20), 64 << 20))
        return pltpu.CompilerParams(dimension_semantics=("parallel",),
                                    vmem_limit_bytes=limit)

    flops = 2 * b_pad * (d_in * d_hid + d_hid * d_hid + d_hid * d_out)
    bytes_accessed = (b_pad * d_in * mxu_b
                      + (d_in * d_hid + d_hid * d_hid + d_hid * d_out) * mxu_b
                      + 2 * d_hid * act_b + d_out * 4
                      + b_pad * d_out * out_b)
    cost = pl.CostEstimate(flops=flops, transcendentals=0,
                           bytes_accessed=bytes_accessed)

    x_spec = pl.BlockSpec((bt, d_in), lambda i: (i, 0))
    o_spec = pl.BlockSpec((bt, d_out), lambda i: (i, 0))

    def _build(single_buffer_weights):
        if single_buffer_weights:
            # Grid-invariant operands: constant index_map keeps them resident;
            # Buffered(1) drops the second pipeline buffer (halves weight VMEM).
            rep = lambda a: pl.BlockSpec(a.shape, lambda i: (0, 0),
                                         pipeline_mode=pl.Buffered(buffer_count=1))
        else:
            rep = lambda a: pl.BlockSpec(a.shape, lambda i: (0, 0))
        return pl.pallas_call(
            functools.partial(mlp_kernel, chunk=chunk),
            out_shape=jax.ShapeDtypeStruct((b_pad, d_out), out_dtype),
            grid_spec=pltpu.PrefetchScalarGridSpec(
                num_scalar_prefetch=0,
                grid=grid,
                in_specs=[x_spec,
                          rep(w0_c), rep(b0_a),
                          rep(w1_c), rep(b1_a),
                          rep(w2_c), rep(b2_f)],
                out_specs=o_spec),
            compiler_params=_compiler_params(1 if single_buffer_weights else 2),
            cost_estimate=cost,
        )

    args = (x_c, w0_c, b0_a, w1_c, b1_a, w2_c, b2_f)
    try:
        out = _build(True)(*args)
    except Exception:
        # TODO(synk): pl.Buffered(1) single-buffering unsupported on this jax
        # build; fall back to default double-buffered resident weights.
        out = _build(False)(*args)

    return out[:B] if b_pad != B else out


def init_mlp_params(key, input_dim, hidden_dim, output_dim):
    """Deterministic init mimicking nn.Linear default (uniform +-1/sqrt(fan_in))."""
    def linear(k, fan_in, fan_out):
        kw, kb = jax.random.split(k)
        bound = 1.0 / jnp.sqrt(fan_in)
        w = jax.random.uniform(kw, (fan_in, fan_out), jnp.float32, -bound, bound)
        b = jax.random.uniform(kb, (1, fan_out), jnp.float32, -bound, bound)
        return w, b

    k0, k1, k2 = jax.random.split(key, 3)
    w0, b0 = linear(k0, input_dim, hidden_dim)
    w1, b1 = linear(k1, hidden_dim, hidden_dim)
    w2, b2 = linear(k2, hidden_dim, output_dim)
    return (w0, b0, w1, b1, w2, b2)


def mlp_reference(x, params, compute_dtype=None, act_dtype=None):
    """Plain-JAX reference.  With compute_dtype/act_dtype=None this is the exact
    PyTorch (f32) forward; otherwise it mirrors the kernel's casts for a tight
    numerical comparison (f32 accumulation throughout)."""
    w0, b0, w1, b1, w2, b2 = params
    cd = compute_dtype if compute_dtype is not None else x.dtype
    ad = act_dtype if act_dtype is not None else jnp.float32

    def dot(a, w):
        return jnp.dot(a.astype(cd), w.astype(cd),
                       preferred_element_type=jnp.float32)

    h = jnp.maximum(dot(x, w0).astype(ad) + b0.astype(ad), 0)
    h = jnp.maximum(dot(h, w1).astype(ad) + b1.astype(ad), 0)
    out = dot(h, w2) + b2.astype(jnp.float32)
    return out.astype(x.dtype)


if __name__ == "__main__":
    # MLPConfig(input_dim=16, hidden_dim=32, output_dim=8, hidden_depth=2,
    #           dropout_prob=None, activation=RELU) at a small batch.
    batch, input_dim, hidden_dim, output_dim = 16, 16, 32, 8

    key = jax.random.PRNGKey(0)
    kx, kp = jax.random.split(key)
    x = jax.random.normal(kx, (batch, input_dim), jnp.float32)
    params = init_mlp_params(kp, input_dim, hidden_dim, output_dim)

    # Default path: bf16 MXU operands, f32 accumulation, auto act dtype.
    out = jax.block_until_ready(mlp_forward(x, params))
    assert out.shape == (batch, output_dim)
    assert out.dtype == jnp.float32

    # Tight check vs. a reference applying the same casts as the kernel.
    ad = _auto_act_dtype(jnp.bfloat16)
    ref_bf16 = mlp_reference(x, params, compute_dtype=jnp.bfloat16, act_dtype=ad)
    assert jnp.allclose(out, ref_bf16, atol=2e-3, rtol=2e-3)

    # Loose semantic check vs. the pure-f32 (PyTorch-equivalent) forward.
    ref_f32 = mlp_reference(x, params)
    assert jnp.allclose(out, ref_f32, atol=5e-2, rtol=3e-2)

    # Full-f32 path (exact module semantics) should match tightly.
    out_f32 = jax.block_until_ready(mlp_forward(x, params, compute_dtype=None))
    assert jnp.allclose(out_f32, ref_f32, atol=1e-5, rtol=1e-5)

    # Awkward batch: exercises even-split tiling, multi-step grid, the
    # unrolled row-chunk loop and the static remainder path.
    xb = jax.random.normal(kx, (520, input_dim), jnp.float32)
    ob = jax.block_until_ready(
        mlp_forward(xb, params, batch_tile=512, row_chunk=128))
    refb = mlp_reference(xb, params, compute_dtype=jnp.bfloat16, act_dtype=ad)
    assert ob.shape == (520, output_dim)
    assert jnp.allclose(ob, refb, atol=2e-3, rtol=2e-3)

    print("KERNEL_OK")
</pallas_src>

<mosaic_0001>
module attributes {stable_mosaic.version = 11 : i64} {
  func.func @mlp_kernel(%arg0: i32, %arg1: memref<16x16xbf16, #tpu.memory_space<vmem>>, %arg2: memref<16x32xbf16, #tpu.memory_space<vmem>>, %arg3: memref<1x32xbf16, #tpu.memory_space<vmem>>, %arg4: memref<32x32xbf16, #tpu.memory_space<vmem>>, %arg5: memref<1x32xbf16, #tpu.memory_space<vmem>>, %arg6: memref<32x8xbf16, #tpu.memory_space<vmem>>, %arg7: memref<1x8xf32, #tpu.memory_space<vmem>>, %arg8: memref<16x8xf32, #tpu.memory_space<vmem>>) attributes {dimension_semantics = [#tpu.dimension_semantics<parallel>], iteration_bounds = array<i64: 1>, scalar_prefetch = 0 : i64, scratch_operands = 0 : i64, tpu.core_type = #tpu.core_type<tc>, window_params = [{transform_indices = @transform_0, window_bounds = array<i64: 16, 16>}, {pipeline_mode = #tpu.pipeline_mode<synchronous>, transform_indices = @transform_1, window_bounds = array<i64: 16, 32>}, {pipeline_mode = #tpu.pipeline_mode<synchronous>, transform_indices = @transform_2, window_bounds = array<i64: 1, 32>}, {pipeline_mode = #tpu.pipeline_mode<synchronous>, transform_indices = @transform_3, window_bounds = array<i64: 32, 32>}, {pipeline_mode = #tpu.pipeline_mode<synchronous>, transform_indices = @transform_4, window_bounds = array<i64: 1, 32>}, {pipeline_mode = #tpu.pipeline_mode<synchronous>, transform_indices = @transform_5, window_bounds = array<i64: 32, 8>}, {pipeline_mode = #tpu.pipeline_mode<synchronous>, transform_indices = @transform_6, window_bounds = array<i64: 1, 8>}, {transform_indices = @transform_7, window_bounds = array<i64: 16, 8>}]} {
    %c0 = arith.constant 0 : index
    %c0_0 = arith.constant 0 : index
    %0 = vector.load %arg2[%c0, %c0_0] : memref<16x32xbf16, #tpu.memory_space<vmem>>, vector<16x32xbf16>
    %c0_1 = arith.constant 0 : index
    %c0_2 = arith.constant 0 : index
    %1 = vector.load %arg3[%c0_1, %c0_2] : memref<1x32xbf16, #tpu.memory_space<vmem>>, vector<1x32xbf16>
    %c0_3 = arith.constant 0 : index
    %c0_4 = arith.constant 0 : index
    %2 = vector.load %arg4[%c0_3, %c0_4] : memref<32x32xbf16, #tpu.memory_space<vmem>>, vector<32x32xbf16>
    %c0_5 = arith.constant 0 : index
    %c0_6 = arith.constant 0 : index
    %3 = vector.load %arg5[%c0_5, %c0_6] : memref<1x32xbf16, #tpu.memory_space<vmem>>, vector<1x32xbf16>
    %c0_7 = arith.constant 0 : index
    %c0_8 = arith.constant 0 : index
    %4 = vector.load %arg6[%c0_7, %c0_8] : memref<32x8xbf16, #tpu.memory_space<vmem>>, vector<32x8xbf16>
    %c0_9 = arith.constant 0 : index
    %c0_10 = arith.constant 0 : index
    %5 = vector.load %arg7[%c0_9, %c0_10] : memref<1x8xf32, #tpu.memory_space<vmem>>, vector<1x8xf32>
    %c0_11 = arith.constant 0 : index
    %c0_12 = arith.constant 0 : index
    %6 = vector.load %arg1[%c0_11, %c0_12] : memref<16x16xbf16, #tpu.memory_space<vmem>>, vector<16x16xbf16>
    %cst = arith.constant dense<0.000000e+00> : vector<16x32xf32>
    %7 = tpu.matmul %6, %0, %cst {dimension_numbers = #tpu.dot_dimension_numbers<[1], [0], [0], [1], [0, 0, 1, 1], [], []>} : vector<16x16xbf16>, vector<16x32xbf16>, vector<16x32xf32> -> vector<16x32xf32>
    %8 = arith.truncf %7 : vector<16x32xf32> to vector<16x32xbf16>
    %9 = vector.broadcast %1 : vector<1x32xbf16> to vector<16x32xbf16>
    %10 = arith.addf %8, %9 : vector<16x32xbf16>
    %cst_13 = arith.constant 0.000000e+00 : bf16
    %11 = vector.broadcast %cst_13 : bf16 to vector<16x32xbf16>
    %12 = arith.maximumf %10, %11 : vector<16x32xbf16>
    %cst_14 = arith.constant dense<0.000000e+00> : vector<16x32xf32>
    %13 = tpu.matmul %12, %2, %cst_14 {dimension_numbers = #tpu.dot_dimension_numbers<[1], [0], [0], [1], [0, 0, 1, 1], [], []>} : vector<16x32xbf16>, vector<32x32xbf16>, vector<16x32xf32> -> vector<16x32xf32>
    %14 = arith.truncf %13 : vector<16x32xf32> to vector<16x32xbf16>
    %15 = vector.broadcast %3 : vector<1x32xbf16> to vector<16x32xbf16>
    %16 = arith.addf %14, %15 : vector<16x32xbf16>
    %cst_15 = arith.constant 0.000000e+00 : bf16
    %17 = vector.broadcast %cst_15 : bf16 to vector<16x32xbf16>
    %18 = arith.maximumf %16, %17 : vector<16x32xbf16>
    %cst_16 = arith.constant dense<0.000000e+00> : vector<16x8xf32>
    %19 = tpu.matmul %18, %4, %cst_16 {dimension_numbers = #tpu.dot_dimension_numbers<[1], [0], [0], [1], [0, 0, 1, 1], [], []>} : vector<16x32xbf16>, vector<32x8xbf16>, vector<16x8xf32> -> vector<16x8xf32>
    %20 = vector.broadcast %5 : vector<1x8xf32> to vector<16x8xf32>
    %21 = arith.addf %19, %20 : vector<16x8xf32>
    %c0_17 = arith.constant 0 : index
    %c0_18 = arith.constant 0 : index
    %22 = vector.load %arg8[%c0_17, %c0_18] : memref<16x8xf32, #tpu.memory_space<vmem>>, vector<16x8xf32>
    tpu.vector_store %arg8[%c0_17, %c0_18], %21 {strides = array<i32>} : memref<16x8xf32, #tpu.memory_space<vmem>>, vector<16x8xf32>,
    return
  }
  func.func @transform_0(%arg0: i32) -> (i32, i32) {
    %c0_i32 = arith.constant 0 : i32
    %c0_i32_0 = arith.constant 0 : i32
    return %arg0, %c0_i32 : i32, i32
  }
  func.func @transform_1(%arg0: i32) -> (i32, i32) {
    %c0_i32 = arith.constant 0 : i32
    %c0_i32_0 = arith.constant 0 : i32
    %c0_i32_1 = arith.constant 0 : i32
    return %c0_i32, %c0_i32_0 : i32, i32
  }
  func.func @transform_2(%arg0: i32) -> (i32, i32) {
    %c0_i32 = arith.constant 0 : i32
    %c0_i32_0 = arith.constant 0 : i32
    %c0_i32_1 = arith.constant 0 : i32
    return %c0_i32, %c0_i32_0 : i32, i32
  }
  func.func @transform_3(%arg0: i32) -> (i32, i32) {
    %c0_i32 = arith.constant 0 : i32
    %c0_i32_0 = arith.constant 0 : i32
    %c0_i32_1 = arith.constant 0 : i32
    return %c0_i32, %c0_i32_0 : i32, i32
  }
  func.func @transform_4(%arg0: i32) -> (i32, i32) {
    %c0_i32 = arith.constant 0 : i32
    %c0_i32_0 = arith.constant 0 : i32
    %c0_i32_1 = arith.constant 0 : i32
    return %c0_i32, %c0_i32_0 : i32, i32
  }
  func.func @transform_5(%arg0: i32) -> (i32, i32) {
    %c0_i32 = arith.constant 0 : i32
    %c0_i32_0 = arith.constant 0 : i32
    %c0_i32_1 = arith.constant 0 : i32
    return %c0_i32, %c0_i32_0 : i32, i32
  }
  func.func @transform_6(%arg0: i32) -> (i32, i32) {
    %c0_i32 = arith.constant 0 : i32
    %c0_i32_0 = arith.constant 0 : i32
    %c0_i32_1 = arith.constant 0 : i32
    return %c0_i32, %c0_i32_0 : i32, i32
  }
  func.func @transform_7(%arg0: i32) -> (i32, i32) {
    %c0_i32 = arith.constant 0 : i32
    %c0_i32_0 = arith.constant 0 : i32
    return %arg0, %c0_i32 : i32, i32
  }
}

module attributes {stable_mosaic.version = 11 : i64} {
  func.func @mlp_kernel(%arg0: i32, %arg1: memref<16x16xbf16, #tpu.memory_space<vmem>>, %arg2: memref<16x32xbf16, #tpu.memory_space<vmem>>, %arg3: memref<1x32xbf16, #tpu.memory_space<vmem>>, %arg4: memref<32x32xbf16, #tpu.memory_space<vmem>>, %arg5: memref<1x32xbf16, #tpu.memory_space<vmem>>, %arg6: memref<32x8xbf16, #tpu.memory_space<vmem>>, %arg7: memref<1x8xf32, #tpu.memory_space<vmem>>, %arg8: memref<16x8xf32, #tpu.memory_space<vmem>>) attributes {dimension_semantics = [#tpu.dimension_semantics<parallel>], iteration_bounds = array<i64: 1>, scalar_prefetch = 0 : i64, scratch_operands = 0 : i64, tpu.core_type = #tpu.core_type<tc>, window_params = [{transform_indices = @transform_0, window_bounds = array<i64: 16, 16>}, {pipeline_mode = #tpu.pipeline_mode<synchronous>, transform_indices = @transform_1, window_bounds = array<i64: 16, 32>}, {pipeline_mode = #tpu.pipeline_mode<synchronous>, transform_indices = @transform_2, window_bounds = array<i64: 1, 32>}, {pipeline_mode = #tpu.pipeline_mode<synchronous>, transform_indices = @transform_3, window_bounds = array<i64: 32, 32>}, {pipeline_mode = #tpu.pipeline_mode<synchronous>, transform_indices = @transform_4, window_bounds = array<i64: 1, 32>}, {pipeline_mode = #tpu.pipeline_mode<synchronous>, transform_indices = @transform_5, window_bounds = array<i64: 32, 8>}, {pipeline_mode = #tpu.pipeline_mode<synchronous>, transform_indices = @transform_6, window_bounds = array<i64: 1, 8>}, {transform_indices = @transform_7, window_bounds = array<i64: 16, 8>}]} {
    %c0 = arith.constant 0 : index
    %c0_0 = arith.constant 0 : index
    %0 = vector.load %arg2[%c0, %c0_0] : memref<16x32xbf16, #tpu.memory_space<vmem>>, vector<16x32xbf16>
    %c0_1 = arith.constant 0 : index
    %c0_2 = arith.constant 0 : index
    %1 = vector.load %arg3[%c0_1, %c0_2] : memref<1x32xbf16, #tpu.memory_space<vmem>>, vector<1x32xbf16>
    %c0_3 = arith.constant 0 : index
    %c0_4 = arith.constant 0 : index
    %2 = vector.load %arg4[%c0_3, %c0_4] : memref<32x32xbf16, #tpu.memory_space<vmem>>, vector<32x32xbf16>
    %c0_5 = arith.constant 0 : index
    %c0_6 = arith.constant 0 : index
    %3 = vector.load %arg5[%c0_5, %c0_6] : memref<1x32xbf16, #tpu.memory_space<vmem>>, vector<1x32xbf16>
    %c0_7 = arith.constant 0 : index
    %c0_8 = arith.constant 0 : index
    %4 = vector.load %arg6[%c0_7, %c0_8] : memref<32x8xbf16, #tpu.memory_space<vmem>>, vector<32x8xbf16>
    %c0_9 = arith.constant 0 : index
    %c0_10 = arith.constant 0 : index
    %5 = vector.load %arg7[%c0_9, %c0_10] : memref<1x8xf32, #tpu.memory_space<vmem>>, vector<1x8xf32>
    %c0_11 = arith.constant 0 : index
    %c0_12 = arith.constant 0 : index
    %6 = vector.load %arg1[%c0_11, %c0_12] : memref<16x16xbf16, #tpu.memory_space<vmem>>, vector<16x16xbf16>
    %cst = arith.constant dense<0.000000e+00> : vector<16x32xf32>
    %7 = tpu.matmul %6, %0, %cst {dimension_numbers = #tpu.dot_dimension_numbers<[1], [0], [0], [1], [0, 0, 1, 1], [], []>} : vector<16x16xbf16>, vector<16x32xbf16>, vector<16x32xf32> -> vector<16x32xf32>
    %8 = arith.truncf %7 : vector<16x32xf32> to vector<16x32xbf16>
    %9 = vector.broadcast %1 : vector<1x32xbf16> to vector<16x32xbf16>
    %10 = arith.addf %8, %9 : vector<16x32xbf16>
    %cst_13 = arith.constant 0.000000e+00 : bf16
    %11 = vector.broadcast %cst_13 : bf16 to vector<16x32xbf16>
    %12 = arith.maximumf %10, %11 : vector<16x32xbf16>
    %cst_14 = arith.constant dense<0.000000e+00> : vector<16x32xf32>
    %13 = tpu.matmul %12, %2, %cst_14 {dimension_numbers = #tpu.dot_dimension_numbers<[1], [0], [0], [1], [0, 0, 1, 1], [], []>} : vector<16x32xbf16>, vector<32x32xbf16>, vector<16x32xf32> -> vector<16x32xf32>
    %14 = arith.truncf %13 : vector<16x32xf32> to vector<16x32xbf16>
    %15 = vector.broadcast %3 : vector<1x32xbf16> to vector<16x32xbf16>
    %16 = arith.addf %14, %15 : vector<16x32xbf16>
    %cst_15 = arith.constant 0.000000e+00 : bf16
    %17 = vector.broadcast %cst_15 : bf16 to vector<16x32xbf16>
    %18 = arith.maximumf %16, %17 : vector<16x32xbf16>
    %cst_16 = arith.constant dense<0.000000e+00> : vector<16x8xf32>
    %19 = tpu.matmul %18, %4, %cst_16 {dimension_numbers = #tpu.dot_dimension_numbers<[1], [0], [0], [1], [0, 0, 1, 1], [], []>} : vector<16x32xbf16>, vector<32x8xbf16>, vector<16x8xf32> -> vector<16x8xf32>
    %20 = vector.broadcast %5 : vector<1x8xf32> to vector<16x8xf32>
    %21 = arith.addf %19, %20 : vector<16x8xf32>
    %c0_17 = arith.constant 0 : index
    %c0_18 = arith.constant 0 : index
    %22 = vector.load %arg8[%c0_17, %c0_18] : memref<16x8xf32, #tpu.memory_space<vmem>>, vector<16x8xf32>
    tpu.vector_store %arg8[%c0_17, %c0_18], %21 {strides = array<i32>} : memref<16x8xf32, #tpu.memory_space<vmem>>, vector<16x8xf32>,
    return
  }
  func.func @transform_0(%arg0: i32) -> (i32, i32) {
    %c0_i32 = arith.constant 0 : i32
    %c0_i32_0 = arith.constant 0 : i32
    return %arg0, %c0_i32 : i32, i32
  }
  func.func @transform_1(%arg0: i32) -> (i32, i32) {
    %c0_i32 = arith.constant 0 : i32
    %c0_i32_0 = arith.constant 0 : i32
    %c0_i32_1 = arith.constant 0 : i32
    return %c0_i32, %c0_i32_0 : i32, i32
  }
  func.func @transform_2(%arg0: i32) -> (i32, i32) {
    %c0_i32 = arith.constant 0 : i32
    %c0_i32_0 = arith.constant 0 : i32
    %c0_i32_1 = arith.constant 0 : i32
    return %c0_i32, %c0_i32_0 : i32, i32
  }
  func.func @transform_3(%arg0: i32) -> (i32, i32) {
    %c0_i32 = arith.constant 0 : i32
    %c0_i32_0 = arith.constant 0 : i32
    %c0_i32_1 = arith.constant 0 : i32
    return %c0_i32, %c0_i32_0 : i32, i32
  }
  func.func @transform_4(%arg0: i32) -> (i32, i32) {
    %c0_i32 = arith.constant 0 : i32
    %c0_i32_0 = arith.constant 0 : i32
    %c0_i32_1 = arith.constant 0 : i32
    return %c0_i32, %c0_i32_0 : i32, i32
  }
  func.func @transform_5(%arg0: i32) -> (i32, i32) {
    %c0_i32 = arith.constant 0 : i32
    %c0_i32_0 = arith.constant 0 : i32
    %c0_i32_1 = arith.constant 0 : i32
    return %c0_i32, %c0_i32_0 : i32, i32
  }
  func.func @transform_6(%arg0: i32) -> (i32, i32) {
    %c0_i32 = arith.constant 0 : i32
    %c0_i32_0 = arith.constant 0 : i32
    %c0_i32_1 = arith.constant 0 : i32
    return %c0_i32, %c0_i32_0 : i32, i32
  }
  func.func @transform_7(%arg0: i32) -> (i32, i32) {
    %c0_i32 = arith.constant 0 : i32
    %c0_i32_0 = arith.constant 0 : i32
    return %arg0, %c0_i32 : i32, i32
  }
}

</mosaic_0001>

<llo_original>
// kernel: tpu_custom_call.1
$region0: #{tpu_custom_call.1}
  #allocation0 [shape = 'u32[]', space=smem, size = 0x4, offset = 0x4, fixed_abs, tag = 'smem constant byte address 0x4 - core index']
  #allocation1 [shape = 'u32[72,128]{1,0:T(1,128)}', space=vmem, size = 0x9000, scoped, tag = 'internal scratch']
  %s0 = inlined_call_operand.hbm [shape: bf16[16,16], index: 0, kind: input, shape index: {}]
  %s1 = inlined_call_operand.hbm [shape: bf16[16,32], index: 1, kind: input, shape index: {}]
  %s2 = inlined_call_operand.vmem [shape: bf16[1,32], index: 2, kind: input, shape index: {}]
  %s3 = inlined_call_operand.vmem [shape: bf16[32,32], index: 3, kind: input, shape index: {}]
  %s4 = inlined_call_operand.vmem [shape: bf16[1,32], index: 4, kind: input, shape index: {}]
  %s5 = inlined_call_operand.vmem [shape: bf16[32,8], index: 5, kind: input, shape index: {}]
  %s6 = inlined_call_operand.vmem [shape: f32[1,8], index: 6, kind: input, shape index: {}]
  %s7 = inlined_call_operand.vmem [shape: f32[16,8], index: 7, kind: output, shape index: {}]
  %s8 = sld [smem:[#allocation0]]
  $region46: #{tpu_custom_call.1} parent=0
    _
  %s10 = ssub.s32 1, %s8
  %s11 = scalar_select 0, %s10, %s8
  $region1: #{tpu_custom_call.1} parent=0
    #allocation2 [shape = 'u8[4096]{0}', space=vmem, size = 0x1000, scoped, tag = 'input window, operand 0, single buffered']
    #allocation3 [shape = 's32[1]{0}', space=sflag, size = 0x4, scoped, tag = 'scoped memory for tpu_custom_call.1']
    #allocation4 [shape = 'u8[4096]{0}', space=vmem, size = 0x1000, scoped, tag = 'input window, operand 1, single buffered']
    #allocation5 [shape = 's32[1]{0}', space=sflag, size = 0x4, scoped, tag = 'scoped memory for tpu_custom_call.1']
    %12 = vsyncpa [#allocation3], 0
    %13 = vsyncpa [#allocation5], 0
    // Predicated region
    $region2: #{tpu_custom_call.1} parent=1 // pred_check
      _
    $region3: #{tpu_custom_call.1} parent=1 // pred_check_branch
      %15 = sbr.rel (0) target = $region5
    $region4: #{tpu_custom_call.1} parent=1 // pred_region
      %17 = vsyncadd [#allocation3], 0
      %s18 = sshll.u32 %s0, 4
      %s19 = int_to_ptr.hbm [resolvable:$true] %s18
      %s20 = sshll.u32 [#allocation2], 4
      %s21 = int_to_ptr.vmem [resolvable:$true] %s20
      %26 = dma.hbm_to_vmem [thread:$0]  %s19, 128, %s21, [#allocation3], 64, 64, 4
    $region5: #{tpu_custom_call.1} parent=1 // pred_fallthru
      _
    // Predicated region
    $region6: #{tpu_custom_call.1} parent=1 // pred_check
      _
    $region7: #{tpu_custom_call.1} parent=1 // pred_check_branch
      %28 = sbr.rel (0) target = $region9
    $region8: #{tpu_custom_call.1} parent=1 // pred_region
      %30 = vsyncadd [#allocation5], 0
      %s31 = sshll.u32 %s1, 4
      %s32 = int_to_ptr.hbm [resolvable:$true] %s31
      %s33 = sshll.u32 [#allocation4], 4
      %s34 = int_to_ptr.vmem [resolvable:$true] %s33
      %39 = dma.hbm_to_vmem [thread:$0]  %s32, 128, %s34, [#allocation5], 64, 64, 4
    $region9: #{tpu_custom_call.1} parent=1 // pred_fallthru
      _
    // Predicated region
    $region10: #{tpu_custom_call.1} parent=1 // pred_check
      _
    $region11: #{tpu_custom_call.1} parent=1 // pred_check_branch
      %41 = sbr.rel (0) target = $region13
    $region12: #{tpu_custom_call.1} parent=1 // pred_region
      _
    $region13: #{tpu_custom_call.1} parent=1 // pred_fallthru
      _
    // Predicated region
    $region14: #{tpu_custom_call.1} parent=1 // pred_check
      _
    $region15: #{tpu_custom_call.1} parent=1 // pred_check_branch
      %43 = sbr.rel (0) target = $region17
    $region16: #{tpu_custom_call.1} parent=1 // pred_region
      _
    $region17: #{tpu_custom_call.1} parent=1 // pred_fallthru
      _
    // Predicated region
    $region18: #{tpu_custom_call.1} parent=1 // pred_check
      _
    $region19: #{tpu_custom_call.1} parent=1 // pred_check_branch
      %45 = sbr.rel (0) target = $region21
    $region20: #{tpu_custom_call.1} parent=1 // pred_region
      _
    $region21: #{tpu_custom_call.1} parent=1 // pred_fallthru
      _
    // Predicated region
    $region22: #{tpu_custom_call.1} parent=1 // pred_check
      _
    $region23: #{tpu_custom_call.1} parent=1 // pred_check_branch
      %47 = sbr.rel (0) target = $region25
    $region24: #{tpu_custom_call.1} parent=1 // pred_region
      _
    $region25: #{tpu_custom_call.1} parent=1 // pred_fallthru
      _
    // Predicated region
    $region26: #{tpu_custom_call.1} parent=1 // pred_check
      _
    $region27: #{tpu_custom_call.1} parent=1 // pred_check_branch
      %49 = sbr.rel (0) target = $region29
    $region28: #{tpu_custom_call.1} parent=1 // pred_region
      _
    $region29: #{tpu_custom_call.1} parent=1 // pred_fallthru
      _
    // Predicated region
    $region30: #{tpu_custom_call.1} parent=1 // pred_check
      _
    $region31: #{tpu_custom_call.1} parent=1 // pred_check_branch
      %51 = sbr.rel (0) target = $region33
    $region32: #{tpu_custom_call.1} parent=1 // pred_region
      %53 = dma.done [#allocation3], 128
    $region33: #{tpu_custom_call.1} parent=1 // pred_fallthru
      _
    // Predicated region
    $region34: #{tpu_custom_call.1} parent=1 // pred_check
      _
    $region35: #{tpu_custom_call.1} parent=1 // pred_check_branch
      %55 = sbr.rel (0) target = $region37
    $region36: #{tpu_custom_call.1} parent=1 // pred_region
      %57 = dma.done [#allocation5], 128
    $region37: #{tpu_custom_call.1} parent=1 // pred_fallthru
      _
    %v59 = vld [vmem:[#allocation4] sm:$0xf]
    %v60 = vld [vmem:[#allocation4 + $0x4] sm:$0xf]
    %v61 = vld [vmem:[%s2] sm:$0x1]
    %v62 = vld [vmem:[%s3] sm:$0xf]
    %v63 = vld [vmem:[%s3 + $0x4] sm:$0xf]
    %v64 = vld [vmem:[%s3 + $0x8] sm:$0xf]
    %v65 = vld [vmem:[%s3 + $0xc] sm:$0xf]
    %v66 = vld [vmem:[%s4] sm:$0x1]
    %v67 = vld [vmem:[%s5] sm:$0xf]
    %v68 = vld [vmem:[%s5 + $0x4] sm:$0xf]
    %v69 = vld [vmem:[%s5 + $0x8] sm:$0xf]
    %v70 = vld [vmem:[%s5 + $0xc] sm:$0xf]
    %v71 = vld [vmem:[%s6] sm:$0x1]
    %v72 = vld [vmem:[#allocation2] sm:$0xf]
    %v73 = vld [vmem:[#allocation2 + $0x4] sm:$0xf]
    %v76 = vunpack.c.l.b16 %v72
    %v77 = vunpack.c.l.b16 %v73
    %v78 = vpack.c.b16 %v77, %v76
    %v81 = vunpack.c.l.b16 %v59
    %v82 = vunpack.c.l.b16 %v60
    %v83 = vpack.c.b16 %v82, %v81
    %vm85 = vcmask 130048
    %v87 = vsel %vm85, %v78, 0
    %89 = vmatpush.bf16.msra.mxu0 0
    %90 = vmatpush.bf16.msra.mxu0 0
    %91 = vmatpush.bf16.msra.mxu0 0
    %92 = vmatpush.bf16.msra.mxu0 0
    %93 = vmatpush.bf16.msra.mxu0 0
    %94 = vmatpush.bf16.msra.mxu0 0
    %95 = vmatpush.bf16.msra.mxu0 0
    %96 = vmatpush.bf16.msra.mxu0 %v83
    %97 = vmatmul.bf16.gmra.mxu0 %v87
    %v98 = vpop.f32.mrf.mxu0
    %v99 = vadd.f32 0.0, %v98
    %v100 = vpop.f32.mrf.mxu0
    %v101 = vadd.f32 0.0, %v100
    %102 = vdwg.mxu0
    %v103 = vpack.c.bf16 %v99, %v99
    %v104 = vpack.c.bf16 %v101, %v101
    %v106 = vpack.i.b16 %v61, %v61
    %v108 = vperm.slane %v106, 0
    %v109 = vunpack.c.l.bf16 %v103
    %v110 = vunpack.c.l.bf16 %v104
    %v111 = vunpack.c.l.bf16 %v108
    %v112 = vadd.f32 %v109, %v111
    %v113 = vadd.f32 %v110, %v111
    %v114 = vpack.c.bf16 %v112, %v112
    %v115 = vpack.c.bf16 %v113, %v113
    %v116 = vunpack.c.l.bf16 %v114
    %v117 = vunpack.c.l.bf16 %v115
    %v118 = vmax.f32 %v116, 0.0
    %v119 = vmax.f32 %v117, 0.0
    %v120 = vpack.c.bf16 %v119, %v118
    %v125 = vunpack.c.l.b16 %v62
    %v126 = vunpack.c.l.b16 %v63
    %v127 = vunpack.c.l.b16 %v64
    %v128 = vunpack.c.l.b16 %v65
    %v129 = vpack.c.b16 %v126, %v125
    %v130 = vpack.c.b16 %v128, %v127
    %vm133 = vcmask 261120
    %v135 = vsel %vm133, %v120, 0
    %137 = vmatpush.bf16.msra.mxu0 0
    %138 = vmatpush.bf16.msra.mxu0 0
    %139 = vmatpush.bf16.msra.mxu0 0
    %140 = vmatpush.bf16.msra.mxu0 0
    %141 = vmatpush.bf16.msra.mxu0 0
    %142 = vmatpush.bf16.msra.mxu0 0
    %143 = vmatpush.bf16.msra.mxu0 %v130
    %144 = vmatpush.bf16.msra.mxu0 %v129
    %145 = vmatmul.bf16.gmra.mxu0 %v135
    %v146 = vpop.f32.mrf.mxu0
    %v147 = vadd.f32 0.0, %v146
    %v148 = vpop.f32.mrf.mxu0
    %v149 = vadd.f32 0.0, %v148
    %150 = vdwg.mxu0
    %v151 = vpack.c.bf16 %v147, %v147
    %v152 = vpack.c.bf16 %v149, %v149
    %v154 = vpack.i.b16 %v66, %v66
    %v156 = vperm.slane %v154, 0
    %v157 = vunpack.c.l.bf16 %v151
    %v158 = vunpack.c.l.bf16 %v152
    %v159 = vunpack.c.l.bf16 %v156
    %v160 = vadd.f32 %v157, %v159
    %v161 = vadd.f32 %v158, %v159
    %v162 = vpack.c.bf16 %v160, %v160
    %v163 = vpack.c.bf16 %v161, %v161
    %v164 = vunpack.c.l.bf16 %v162
    %v165 = vunpack.c.l.bf16 %v163
    %v166 = vmax.f32 %v164, 0.0
    %v167 = vmax.f32 %v165, 0.0
    %v168 = vpack.c.bf16 %v167, %v166
    %v170 = vperm.slane %v71, 0
    %v176 = vunpack.c.l.b16 %v67
    %v177 = vunpack.c.l.b16 %v68
    %v178 = vunpack.c.l.b16 %v69
    %v179 = vunpack.c.l.b16 %v70
    %v180 = vpack.c.b16 %v177, %v176
    %v181 = vpack.c.b16 %v179, %v178
    %v185 = vsel %vm133, %v168, 0
    %187 = vmatpush.bf16.msra.mxu0 0
    %188 = vmatpush.bf16.msra.mxu0 0
    %189 = vmatpush.bf16.msra.mxu0 0
    %190 = vmatpush.bf16.msra.mxu0 0
    %191 = vmatpush.bf16.msra.mxu0 0
    %192 = vmatpush.bf16.msra.mxu0 0
    %193 = vmatpush.bf16.msra.mxu0 %v181
    %194 = vmatpush.bf16.msra.mxu0 %v180
    %195 = vmatmul.bf16.gmra.mxu0 %v185
    %v196 = vpop.f32.mrf.mxu0
    %v197 = vadd.f32 %v170, %v196
    %v198 = vpop.f32.mrf.mxu0
    %v199 = vadd.f32 %v170, %v198
    %200 = vdwg.mxu0
    %vm201 = vcmask 64512
    %202 = vst.msk [vmem:[%s7] sm:$0xff] %vm201, %v197
    %203 = vst.msk [vmem:[%s7 + $0x8] sm:$0xff] %vm201, %v199
    // Predicated region
    $region38: #{tpu_custom_call.1} parent=1 // pred_check
      _
    $region39: #{tpu_custom_call.1} parent=1 // pred_check_branch
      %205 = sbr.rel (0) target = $region41
    $region40: #{tpu_custom_call.1} parent=1 // pred_region
      _
    $region41: #{tpu_custom_call.1} parent=1 // pred_fallthru
      _
    // Predicated region
    $region42: #{tpu_custom_call.1} parent=1 // pred_check
      _
    $region43: #{tpu_custom_call.1} parent=1 // pred_check_branch
      %207 = sbr.rel (0) target = $region45
    $region44: #{tpu_custom_call.1} parent=1 // pred_region
      _
    $region45: #{tpu_custom_call.1} parent=1 // pred_fallthru
      _
    %208 = vsyncpa [#allocation3], 1
    %209 = vsyncpa [#allocation5], 1

// kernel: tpu_custom_call.1
$region0: #{tpu_custom_call.1}
  #allocation0 [shape = 'u32[]', space=smem, size = 0x4, offset = 0x4, fixed_abs, tag = 'smem constant byte address 0x4 - core index']
  #allocation1 [shape = 'u32[72,128]{1,0:T(1,128)}', space=vmem, size = 0x9000, scoped, tag = 'internal scratch']
  %s0 = inlined_call_operand.hbm [shape: bf16[16,16], index: 0, kind: input, shape index: {}]
  %s1 = inlined_call_operand.hbm [shape: bf16[16,32], index: 1, kind: input, shape index: {}]
  %s2 = inlined_call_operand.vmem [shape: bf16[1,32], index: 2, kind: input, shape index: {}]
  %s3 = inlined_call_operand.vmem [shape: bf16[32,32], index: 3, kind: input, shape index: {}]
  %s4 = inlined_call_operand.vmem [shape: bf16[1,32], index: 4, kind: input, shape index: {}]
  %s5 = inlined_call_operand.vmem [shape: bf16[32,8], index: 5, kind: input, shape index: {}]
  %s6 = inlined_call_operand.vmem [shape: f32[1,8], index: 6, kind: input, shape index: {}]
  %s7 = inlined_call_operand.vmem [shape: f32[16,8], index: 7, kind: output, shape index: {}]
  %s8 = sld [smem:[#allocation0]]
  $region46: #{tpu_custom_call.1} parent=0
    _
  %s10 = ssub.s32 1, %s8
  %s11 = scalar_select 0, %s10, %s8
  $region1: #{tpu_custom_call.1} parent=0
    #allocation2 [shape = 'u8[4096]{0}', space=vmem, size = 0x1000, scoped, tag = 'input window, operand 0, single buffered']
    #allocation3 [shape = 's32[1]{0}', space=sflag, size = 0x4, scoped, tag = 'scoped memory for tpu_custom_call.1']
    #allocation4 [shape = 'u8[4096]{0}', space=vmem, size = 0x1000, scoped, tag = 'input window, operand 1, single buffered']
    #allocation5 [shape = 's32[1]{0}', space=sflag, size = 0x4, scoped, tag = 'scoped memory for tpu_custom_call.1']
    %12 = vsyncpa [#allocation3], 0
    %13 = vsyncpa [#allocation5], 0
    // Predicated region
    $region2: #{tpu_custom_call.1} parent=1 // pred_check
      _
    $region3: #{tpu_custom_call.1} parent=1 // pred_check_branch
      %15 = sbr.rel (0) target = $region5
    $region4: #{tpu_custom_call.1} parent=1 // pred_region
      %17 = vsyncadd [#allocation3], 0
      %s18 = sshll.u32 %s0, 4
      %s19 = int_to_ptr.hbm [resolvable:$true] %s18
      %s20 = sshll.u32 [#allocation2], 4
      %s21 = int_to_ptr.vmem [resolvable:$true] %s20
      %26 = dma.hbm_to_vmem [thread:$0]  %s19, 128, %s21, [#allocation3], 64, 64, 4
    $region5: #{tpu_custom_call.1} parent=1 // pred_fallthru
      _
    // Predicated region
    $region6: #{tpu_custom_call.1} parent=1 // pred_check
      _
    $region7: #{tpu_custom_call.1} parent=1 // pred_check_branch
      %28 = sbr.rel (0) target = $region9
    $region8: #{tpu_custom_call.1} parent=1 // pred_region
      %30 = vsyncadd [#allocation5], 0
      %s31 = sshll.u32 %s1, 4
      %s32 = int_to_ptr.hbm [resolvable:$true] %s31
      %s33 = sshll.u32 [#allocation4], 4
      %s34 = int_to_ptr.vmem [resolvable:$true] %s33
      %39 = dma.hbm_to_vmem [thread:$0]  %s32, 128, %s34, [#allocation5], 64, 64, 4
    $region9: #{tpu_custom_call.1} parent=1 // pred_fallthru
      _
    // Predicated region
    $region10: #{tpu_custom_call.1} parent=1 // pred_check
      _
    $region11: #{tpu_custom_call.1} parent=1 // pred_check_branch
      %41 = sbr.rel (0) target = $region13
    $region12: #{tpu_custom_call.1} parent=1 // pred_region
      _
    $region13: #{tpu_custom_call.1} parent=1 // pred_fallthru
      _
    // Predicated region
    $region14: #{tpu_custom_call.1} parent=1 // pred_check
      _
    $region15: #{tpu_custom_call.1} parent=1 // pred_check_branch
      %43 = sbr.rel (0) target = $region17
    $region16: #{tpu_custom_call.1} parent=1 // pred_region
      _
    $region17: #{tpu_custom_call.1} parent=1 // pred_fallthru
      _
    // Predicated region
    $region18: #{tpu_custom_call.1} parent=1 // pred_check
      _
    $region19: #{tpu_custom_call.1} parent=1 // pred_check_branch
      %45 = sbr.rel (0) target = $region21
    $region20: #{tpu_custom_call.1} parent=1 // pred_region
      _
    $region21: #{tpu_custom_call.1} parent=1 // pred_fallthru
      _
    // Predicated region
    $region22: #{tpu_custom_call.1} parent=1 // pred_check
      _
    $region23: #{tpu_custom_call.1} parent=1 // pred_check_branch
      %47 = sbr.rel (0) target = $region25
    $region24: #{tpu_custom_call.1} parent=1 // pred_region
      _
    $region25: #{tpu_custom_call.1} parent=1 // pred_fallthru
      _
    // Predicated region
    $region26: #{tpu_custom_call.1} parent=1 // pred_check
      _
    $region27: #{tpu_custom_call.1} parent=1 // pred_check_branch
      %49 = sbr.rel (0) target = $region29
    $region28: #{tpu_custom_call.1} parent=1 // pred_region
      _
    $region29: #{tpu_custom_call.1} parent=1 // pred_fallthru
      _
    // Predicated region
    $region30: #{tpu_custom_call.1} parent=1 // pred_check
      _
    $region31: #{tpu_custom_call.1} parent=1 // pred_check_branch
      %51 = sbr.rel (0) target = $region33
    $region32: #{tpu_custom_call.1} parent=1 // pred_region
      %53 = dma.done [#allocation3], 128
    $region33: #{tpu_custom_call.1} parent=1 // pred_fallthru
      _
    // Predicated region
    $region34: #{tpu_custom_call.1} parent=1 // pred_check
      _
    $region35: #{tpu_custom_call.1} parent=1 // pred_check_branch
      %55 = sbr.rel (0) target = $region37
    $region36: #{tpu_custom_call.1} parent=1 // pred_region
      %57 = dma.done [#allocation5], 128
    $region37: #{tpu_custom_call.1} parent=1 // pred_fallthru
      _
    %v59 = vld [vmem:[#allocation4] sm:$0xf]
    %v60 = vld [vmem:[#allocation4 + $0x4] sm:$0xf]
    %v61 = vld [vmem:[%s2] sm:$0x1]
    %v62 = vld [vmem:[%s3] sm:$0xf]
    %v63 = vld [vmem:[%s3 + $0x4] sm:$0xf]
    %v64 = vld [vmem:[%s3 + $0x8] sm:$0xf]
    %v65 = vld [vmem:[%s3 + $0xc] sm:$0xf]
    %v66 = vld [vmem:[%s4] sm:$0x1]
    %v67 = vld [vmem:[%s5] sm:$0xf]
    %v68 = vld [vmem:[%s5 + $0x4] sm:$0xf]
    %v69 = vld [vmem:[%s5 + $0x8] sm:$0xf]
    %v70 = vld [vmem:[%s5 + $0xc] sm:$0xf]
    %v71 = vld [vmem:[%s6] sm:$0x1]
    %v72 = vld [vmem:[#allocation2] sm:$0xf]
    %v73 = vld [vmem:[#allocation2 + $0x4] sm:$0xf]
    %v76 = vunpack.c.l.b16 %v72
    %v77 = vunpack.c.l.b16 %v73
    %v78 = vpack.c.b16 %v77, %v76
    %v81 = vunpack.c.l.b16 %v59
    %v82 = vunpack.c.l.b16 %v60
    %v83 = vpack.c.b16 %v82, %v81
    %vm85 = vcmask 130048
    %v87 = vsel %vm85, %v78, 0
    %89 = vmatpush.bf16.msra.mxu0 0
    %90 = vmatpush.bf16.msra.mxu0 0
    %91 = vmatpush.bf16.msra.mxu0 0
    %92 = vmatpush.bf16.msra.mxu0 0
    %93 = vmatpush.bf16.msra.mxu0 0
    %94 = vmatpush.bf16.msra.mxu0 0
    %95 = vmatpush.bf16.msra.mxu0 0
    %96 = vmatpush.bf16.msra.mxu0 %v83
    %97 = vmatmul.bf16.gmra.mxu0 %v87
    %v98 = vpop.f32.mrf.mxu0
    %v99 = vadd.f32 0.0, %v98
    %v100 = vpop.f32.mrf.mxu0
    %v101 = vadd.f32 0.0, %v100
    %102 = vdwg.mxu0
    %v103 = vpack.c.bf16 %v99, %v99
    %v104 = vpack.c.bf16 %v101, %v101
    %v106 = vpack.i.b16 %v61, %v61
    %v108 = vperm.slane %v106, 0
    %v109 = vunpack.c.l.bf16 %v103
    %v110 = vunpack.c.l.bf16 %v104
    %v111 = vunpack.c.l.bf16 %v108
    %v112 = vadd.f32 %v109, %v111
    %v113 = vadd.f32 %v110, %v111
    %v114 = vpack.c.bf16 %v112, %v112
    %v115 = vpack.c.bf16 %v113, %v113
    %v116 = vunpack.c.l.bf16 %v114
    %v117 = vunpack.c.l.bf16 %v115
    %v118 = vmax.f32 %v116, 0.0
    %v119 = vmax.f32 %v117, 0.0
    %v120 = vpack.c.bf16 %v119, %v118
    %v125 = vunpack.c.l.b16 %v62
    %v126 = vunpack.c.l.b16 %v63
    %v127 = vunpack.c.l.b16 %v64
    %v128 = vunpack.c.l.b16 %v65
    %v129 = vpack.c.b16 %v126, %v125
    %v130 = vpack.c.b16 %v128, %v127
    %vm133 = vcmask 261120
    %v135 = vsel %vm133, %v120, 0
    %137 = vmatpush.bf16.msra.mxu0 0
    %138 = vmatpush.bf16.msra.mxu0 0
    %139 = vmatpush.bf16.msra.mxu0 0
    %140 = vmatpush.bf16.msra.mxu0 0
    %141 = vmatpush.bf16.msra.mxu0 0
    %142 = vmatpush.bf16.msra.mxu0 0
    %143 = vmatpush.bf16.msra.mxu0 %v130
    %144 = vmatpush.bf16.msra.mxu0 %v129
    %145 = vmatmul.bf16.gmra.mxu0 %v135
    %v146 = vpop.f32.mrf.mxu0
    %v147 = vadd.f32 0.0, %v146
    %v148 = vpop.f32.mrf.mxu0
    %v149 = vadd.f32 0.0, %v148
    %150 = vdwg.mxu0
    %v151 = vpack.c.bf16 %v147, %v147
    %v152 = vpack.c.bf16 %v149, %v149
    %v154 = vpack.i.b16 %v66, %v66
    %v156 = vperm.slane %v154, 0
    %v157 = vunpack.c.l.bf16 %v151
    %v158 = vunpack.c.l.bf16 %v152
    %v159 = vunpack.c.l.bf16 %v156
    %v160 = vadd.f32 %v157, %v159
    %v161 = vadd.f32 %v158, %v159
    %v162 = vpack.c.bf16 %v160, %v160
    %v163 = vpack.c.bf16 %v161, %v161
    %v164 = vunpack.c.l.bf16 %v162
    %v165 = vunpack.c.l.bf16 %v163
    %v166 = vmax.f32 %v164, 0.0
    %v167 = vmax.f32 %v165, 0.0
    %v168 = vpack.c.bf16 %v167, %v166
    %v170 = vperm.slane %v71, 0
    %v176 = vunpack.c.l.b16 %v67
    %v177 = vunpack.c.l.b16 %v68
    %v178 = vunpack.c.l.b16 %v69
    %v179 = vunpack.c.l.b16 %v70
    %v180 = vpack.c.b16 %v177, %v176
    %v181 = vpack.c.b16 %v179, %v178
    %v185 = vsel %vm133, %v168, 0
    %187 = vmatpush.bf16.msra.mxu0 0
    %188 = vmatpush.bf16.msra.mxu0 0
    %189 = vmatpush.bf16.msra.mxu0 0
    %190 = vmatpush.bf16.msra.mxu0 0
    %191 = vmatpush.bf16.msra.mxu0 0
    %192 = vmatpush.bf16.msra.mxu0 0
    %193 = vmatpush.bf16.msra.mxu0 %v181
    %194 = vmatpush.bf16.msra.mxu0 %v180
    %195 = vmatmul.bf16.gmra.mxu0 %v185
    %v196 = vpop.f32.mrf.mxu0
    %v197 = vadd.f32 %v170, %v196
    %v198 = vpop.f32.mrf.mxu0
    %v199 = vadd.f32 %v170, %v198
    %200 = vdwg.mxu0
    %vm201 = vcmask 64512
    %202 = vst.msk [vmem:[%s7] sm:$0xff] %vm201, %v197
    %203 = vst.msk [vmem:[%s7 + $0x8] sm:$0xff] %vm201, %v199
    // Predicated region
    $region38: #{tpu_custom_call.1} parent=1 // pred_check
      _
    $region39: #{tpu_custom_call.1} parent=1 // pred_check_branch
      %205 = sbr.rel (0) target = $region41
    $region40: #{tpu_custom_call.1} parent=1 // pred_region
      _
    $region41: #{tpu_custom_call.1} parent=1 // pred_fallthru
      _
    // Predicated region
    $region42: #{tpu_custom_call.1} parent=1 // pred_check
      _
    $region43: #{tpu_custom_call.1} parent=1 // pred_check_branch
      %207 = sbr.rel (0) target = $region45
    $region44: #{tpu_custom_call.1} parent=1 // pred_region
      _
    $region45: #{tpu_custom_call.1} parent=1 // pred_fallthru
      _
    %208 = vsyncpa [#allocation3], 1
    %209 = vsyncpa [#allocation5], 1

</llo_original>
